<compile_context>
chip_gen: v7x
topology: tpu7x:2x2x1
jax: 0.10.0
libtpu: 0.0.40
codegen_flags: <defaults>
</compile_context>

<pallas_src>
import functools
import math

import jax
import jax.numpy as jnp
from jax.experimental import pallas as pl
from jax.experimental.pallas import tpu as pltpu


def _leaky_relu(x, negative_slope=0.2):
    return jnp.where(x > 0, x, negative_slope * x)


def discriminator_kernel(x_ref, w1_ref, b1_ref, w2_ref, b2_ref, w3_ref, b3_ref,
                         out_ref):
    # x tile: (TM, in_dim) f32 -> bf16 for the MXU (f32 accumulation below).
    x = x_ref[...].astype(jnp.bfloat16)

    # Layer 1: Linear(in_dim, 512) + LeakyReLU(0.2)   (bf16 MXU, f32 accum)
    h1 = jnp.dot(x, w1_ref[...], preferred_element_type=jnp.float32) + b1_ref[...]
    h1 = _leaky_relu(h1)

    # Layer 2: Linear(512, 256) + LeakyReLU(0.2)      (bf16 MXU, f32 accum)
    h2 = jnp.dot(h1.astype(jnp.bfloat16), w2_ref[...],
                 preferred_element_type=jnp.float32) + b2_ref[...]
    h2 = _leaky_relu(h2)

    # Layer 3: Linear(256, 1) + Sigmoid, computed as (1,256) . (TM,256)^T
    # -> (1, TM) so the result is lane-dense (unmasked stores) instead of a
    # (TM, 1) column of masked single-lane stores.
    logits = jax.lax.dot_general(
        w3_ref[...], h2.astype(jnp.bfloat16),
        dimension_numbers=(((1,), (1,)), ((), ())),
        preferred_element_type=jnp.float32) + b3_ref[...]
    out_ref[...] = jax.nn.sigmoid(logits).reshape(out_ref.shape)


def _round_up(x, m):
    return ((x + m - 1) // m) * m


def _choose_tm(batch, tm_max=512):
    """Adaptive batch-tile size (sublane-aligned).

    Tiny batches: a single small tile (latency path, minimal padded rows).
    Moderate/large batches: >=2 tiles so the 'parallel' axis can use both
    v7x TensorCores; 128-row granularity for MXU alignment; capped at tm_max.
    """
    b8 = max(8, _round_up(batch, 8))
    if b8 <= 128:
        return b8
    return min(tm_max, _round_up(-(-b8 // 2), 128))


@functools.partial(jax.jit, static_argnames=("tm_max",))
def discriminator_forward(x, params, tm_max=512):
    """x: (B, in_dim) float32. Returns (B, 1) float32 validity scores."""
    w1, b1, w2, b2, w3_row, b3 = params
    B, in_dim = x.shape
    assert in_dim == w1.shape[0]
    h1_dim, h2_dim = w1.shape[1], w2.shape[1]

    tm = _choose_tm(B, tm_max)
    b_pad = _round_up(B, tm)
    if b_pad != B:                       # pad batch rows only when needed
        x = jnp.pad(x, ((0, b_pad - B), (0, 0)))
    grid = (b_pad // tm,)

    const2 = lambda i: (0, 0)
    weight_bytes = (w1.size * w1.dtype.itemsize + w2.size * w2.dtype.itemsize
                    + w3_row.size * w3_row.dtype.itemsize
                    + b1.size * 4 + b2.size * 4 + b3.size * 4)
    cost = pl.CostEstimate(
        flops=2 * b_pad * (in_dim * h1_dim + h1_dim * h2_dim + h2_dim),
        transcendentals=2 * b_pad,          # sigmoid = exp + reciprocal / row
        bytes_accessed=weight_bytes + b_pad * in_dim * 4 + b_pad * 4,
    )

    out = pl.pallas_call(
        discriminator_kernel,
        out_shape=jax.ShapeDtypeStruct((grid[0], 1, tm), jnp.float32),
        grid=grid,
        in_specs=[
            pl.BlockSpec((tm, in_dim), lambda i: (i, 0)),   # x tile
            pl.BlockSpec((in_dim, h1_dim), const2),         # w1 (VMEM resident)
            pl.BlockSpec((1, h1_dim), const2),              # b1
            pl.BlockSpec((h1_dim, h2_dim), const2),         # w2 (VMEM resident)
            pl.BlockSpec((1, h2_dim), const2),              # b2
            pl.BlockSpec((1, h2_dim), const2),              # w3 row
            pl.BlockSpec((1, 1), const2),                   # b3
        ],
        out_specs=pl.BlockSpec((1, 1, tm), lambda i: (i, 0, 0)),
        compiler_params=pltpu.CompilerParams(
            dimension_semantics=("parallel",)),
        cost_estimate=cost,
    )(x, w1, b1, w2, b2, w3_row, b3)

    return out.reshape(b_pad, 1)[:B]


def init_params(key, in_dim):
    """nn.Linear-style uniform(+-1/sqrt(fan_in)) init.  Weights are stored
    transposed, (in_features, out_features), so the kernel computes x @ W + b.
    Matmul weights are bf16 (half the HBM->VMEM traffic, f32 MXU accumulation);
    biases stay f32; the last layer is a (1, 256) bf16 row."""
    dims = [(in_dim, 512), (512, 256), (256, 1)]
    raw = []
    for fin, fout in dims:
        kw, kb, key = jax.random.split(key, 3)
        bound = 1.0 / math.sqrt(fin)
        w = jax.random.uniform(kw, (fin, fout), jnp.float32, -bound, bound)
        b = jax.random.uniform(kb, (1, fout), jnp.float32, -bound, bound)
        raw.append((w, b))
    (w1, b1), (w2, b2), (w3, b3) = raw
    return (w1.astype(jnp.bfloat16), b1,
            w2.astype(jnp.bfloat16), b2,
            w3.T.astype(jnp.bfloat16),      # (1, 256)
            b3.reshape(1, 1))


def _reference(x, params):
    """Plain-JAX reference mirroring the kernel's bf16 quantization points."""
    w1, b1, w2, b2, w3_row, b3 = params
    f32 = jnp.float32
    xb = x.astype(jnp.bfloat16).astype(f32)
    h1 = xb @ w1.astype(f32) + b1
    h1 = jnp.where(h1 > 0, h1, 0.2 * h1)
    h2 = h1.astype(jnp.bfloat16).astype(f32) @ w2.astype(f32) + b2
    h2 = jnp.where(h2 > 0, h2, 0.2 * h2)
    logits = h2.astype(jnp.bfloat16).astype(f32) @ w3_row.astype(f32).T + b3
    return jax.nn.sigmoid(logits)


if __name__ == "__main__":
    # Config consistent with the module's __init__:
    # in_dim = (comb(max_nodes+1, 2) - max_nodes) * edge_dim + max_nodes * node_dim
    max_nodes_in_graph, node_dim, edge_dim = 8, 4, 4
    in_dim = (math.comb(max_nodes_in_graph + 1, 2) - max_nodes_in_graph) * edge_dim \
             + max_nodes_in_graph * node_dim            # = 28*4 + 8*4 = 144

    key = jax.random.PRNGKey(0)
    kx, kx2, kp = jax.random.split(key, 3)
    params = init_params(kp, in_dim)

    # Tiny-batch path (single small tile, latency-oriented).
    mol = jax.random.normal(kx, (2, in_dim), jnp.float32)
    validity = jax.block_until_ready(discriminator_forward(mol, params))
    assert validity.shape == (2, 1)
    assert bool(jnp.all((validity >= 0.0) & (validity <= 1.0)))
    assert bool(jnp.allclose(validity, _reference(mol, params), atol=2e-2)), \
        "mismatch vs reference (tiny batch)"

    # Multi-tile path (grid > 1 -> both v7x cores, ragged batch padded to tile).
    mol2 = jax.random.normal(kx2, (384, in_dim), jnp.float32)
    validity2 = jax.block_until_ready(discriminator_forward(mol2, params))
    assert validity2.shape == (384, 1)
    assert bool(jnp.all((validity2 >= 0.0) & (validity2 <= 1.0)))
    assert bool(jnp.allclose(validity2, _reference(mol2, params), atol=2e-2)), \
        "mismatch vs reference (multi-tile batch)"

    print("KERNEL_OK")
</pallas_src>

<mosaic_0001>
module attributes {stable_mosaic.version = 11 : i64} {
  func.func @discriminator_kernel(%arg0: i32, %arg1: memref<8x144xf32, #tpu.memory_space<vmem>>, %arg2: memref<144x512xbf16, #tpu.memory_space<vmem>>, %arg3: memref<1x512xf32, #tpu.memory_space<vmem>>, %arg4: memref<512x256xbf16, #tpu.memory_space<vmem>>, %arg5: memref<1x256xf32, #tpu.memory_space<vmem>>, %arg6: memref<1x256xbf16, #tpu.memory_space<vmem>>, %arg7: memref<1x1xf32, #tpu.memory_space<vmem>>, %arg8: memref<1x1x8xf32, #tpu.memory_space<vmem>>) attributes {dimension_semantics = [#tpu.dimension_semantics<parallel>], iteration_bounds = array<i64: 1>, scalar_prefetch = 0 : i64, scratch_operands = 0 : i64, tpu.core_type = #tpu.core_type<tc>, window_params = [{transform_indices = @transform_0, window_bounds = array<i64: 8, 144>}, {pipeline_mode = #tpu.pipeline_mode<synchronous>, transform_indices = @transform_1, window_bounds = array<i64: 144, 512>}, {pipeline_mode = #tpu.pipeline_mode<synchronous>, transform_indices = @transform_2, window_bounds = array<i64: 1, 512>}, {pipeline_mode = #tpu.pipeline_mode<synchronous>, transform_indices = @transform_3, window_bounds = array<i64: 512, 256>}, {pipeline_mode = #tpu.pipeline_mode<synchronous>, transform_indices = @transform_4, window_bounds = array<i64: 1, 256>}, {pipeline_mode = #tpu.pipeline_mode<synchronous>, transform_indices = @transform_5, window_bounds = array<i64: 1, 256>}, {pipeline_mode = #tpu.pipeline_mode<synchronous>, transform_indices = @transform_6, window_bounds = array<i64: 1, 1>}, {transform_indices = @transform_7, window_bounds = array<i64: 1, 1, 8>}]} {
    %c0 = arith.constant 0 : index
    %c0_0 = arith.constant 0 : index
    %0 = vector.load %arg1[%c0, %c0_0] : memref<8x144xf32, #tpu.memory_space<vmem>>, vector<8x144xf32>
    %1 = arith.truncf %0 : vector<8x144xf32> to vector<8x144xbf16>
    %c0_1 = arith.constant 0 : index
    %c0_2 = arith.constant 0 : index
    %2 = vector.load %arg2[%c0_1, %c0_2] : memref<144x512xbf16, #tpu.memory_space<vmem>>, vector<144x512xbf16>
    %cst = arith.constant dense<0.000000e+00> : vector<8x512xf32>
    %3 = tpu.matmul %1, %2, %cst {dimension_numbers = #tpu.dot_dimension_numbers<[1], [0], [0], [1], [0, 0, 1, 1], [], []>} : vector<8x144xbf16>, vector<144x512xbf16>, vector<8x512xf32> -> vector<8x512xf32>
    %c0_3 = arith.constant 0 : index
    %c0_4 = arith.constant 0 : index
    %4 = vector.load %arg3[%c0_3, %c0_4] : memref<1x512xf32, #tpu.memory_space<vmem>>, vector<1x512xf32>
    %5 = vector.broadcast %4 : vector<1x512xf32> to vector<8x512xf32>
    %6 = arith.addf %3, %5 : vector<8x512xf32>
    %cst_5 = arith.constant 0.000000e+00 : f32
    %7 = vector.broadcast %cst_5 : f32 to vector<8x512xf32>
    %8 = arith.cmpf ogt, %6, %7 : vector<8x512xf32>
    %cst_6 = arith.constant 2.000000e-01 : f32
    %9 = vector.broadcast %cst_6 : f32 to vector<8x512xf32>
    %10 = arith.mulf %9, %6 : vector<8x512xf32>
    %11 = arith.select %8, %6, %10 : vector<8x512xi1>, vector<8x512xf32>
    %12 = arith.truncf %11 : vector<8x512xf32> to vector<8x512xbf16>
    %c0_7 = arith.constant 0 : index
    %c0_8 = arith.constant 0 : index
    %13 = vector.load %arg4[%c0_7, %c0_8] : memref<512x256xbf16, #tpu.memory_space<vmem>>, vector<512x256xbf16>
    %cst_9 = arith.constant dense<0.000000e+00> : vector<8x256xf32>
    %14 = tpu.matmul %12, %13, %cst_9 {dimension_numbers = #tpu.dot_dimension_numbers<[1], [0], [0], [1], [0, 0, 1, 1], [], []>} : vector<8x512xbf16>, vector<512x256xbf16>, vector<8x256xf32> -> vector<8x256xf32>
    %c0_10 = arith.constant 0 : index
    %c0_11 = arith.constant 0 : index
    %15 = vector.load %arg5[%c0_10, %c0_11] : memref<1x256xf32, #tpu.memory_space<vmem>>, vector<1x256xf32>
    %16 = vector.broadcast %15 : vector<1x256xf32> to vector<8x256xf32>
    %17 = arith.addf %14, %16 : vector<8x256xf32>
    %cst_12 = arith.constant 0.000000e+00 : f32
    %18 = vector.broadcast %cst_12 : f32 to vector<8x256xf32>
    %19 = arith.cmpf ogt, %17, %18 : vector<8x256xf32>
    %cst_13 = arith.constant 2.000000e-01 : f32
    %20 = vector.broadcast %cst_13 : f32 to vector<8x256xf32>
    %21 = arith.mulf %20, %17 : vector<8x256xf32>
    %22 = arith.select %19, %17, %21 : vector<8x256xi1>, vector<8x256xf32>
    %c0_14 = arith.constant 0 : index
    %c0_15 = arith.constant 0 : index
    %23 = vector.load %arg6[%c0_14, %c0_15] : memref<1x256xbf16, #tpu.memory_space<vmem>>, vector<1x256xbf16>
    %24 = arith.truncf %22 : vector<8x256xf32> to vector<8x256xbf16>
    %cst_16 = arith.constant dense<0.000000e+00> : vector<1x8xf32>
    %25 = tpu.matmul %23, %24, %cst_16 {dimension_numbers = #tpu.dot_dimension_numbers<[1], [1], [0], [0], [0, 0, 1, 0], [], []>} : vector<1x256xbf16>, vector<8x256xbf16>, vector<1x8xf32> -> vector<1x8xf32>
    %c0_17 = arith.constant 0 : index
    %c0_18 = arith.constant 0 : index
    %26 = vector.load %arg7[%c0_17, %c0_18] : memref<1x1xf32, #tpu.memory_space<vmem>>, vector<1x1xf32>
    %27 = vector.broadcast %26 : vector<1x1xf32> to vector<1x8xf32>
    %28 = arith.addf %25, %27 : vector<1x8xf32>
    %29 = arith.negf %28 : vector<1x8xf32>
    %30 = math.exp %29 : vector<1x8xf32>
    %cst_19 = arith.constant 1.000000e+00 : f32
    %31 = vector.broadcast %cst_19 : f32 to vector<1x8xf32>
    %32 = arith.addf %31, %30 : vector<1x8xf32>
    %33 = arith.divf %31, %32 : vector<1x8xf32>
    %34 = vector.shape_cast %33 : vector<1x8xf32> to vector<1x1x8xf32>
    %c0_20 = arith.constant 0 : index
    %c0_21 = arith.constant 0 : index
    %c0_22 = arith.constant 0 : index
    %35 = vector.load %arg8[%c0_20, %c0_21, %c0_22] : memref<1x1x8xf32, #tpu.memory_space<vmem>>, vector<1x1x8xf32>
    tpu.vector_store %arg8[%c0_20, %c0_21, %c0_22], %34 {strides = array<i32>} : memref<1x1x8xf32, #tpu.memory_space<vmem>>, vector<1x1x8xf32>,
    return
  }
  func.func @transform_0(%arg0: i32) -> (i32, i32) {
    %c0_i32 = arith.constant 0 : i32
    %c0_i32_0 = arith.constant 0 : i32
    return %arg0, %c0_i32 : i32, i32
  }
  func.func @transform_1(%arg0: i32) -> (i32, i32) {
    %c0_i32 = arith.constant 0 : i32
    %c0_i32_0 = arith.constant 0 : i32
    %c0_i32_1 = arith.constant 0 : i32
    return %c0_i32, %c0_i32_0 : i32, i32
  }
  func.func @transform_2(%arg0: i32) -> (i32, i32) {
    %c0_i32 = arith.constant 0 : i32
    %c0_i32_0 = arith.constant 0 : i32
    %c0_i32_1 = arith.constant 0 : i32
    return %c0_i32, %c0_i32_0 : i32, i32
  }
  func.func @transform_3(%arg0: i32) -> (i32, i32) {
    %c0_i32 = arith.constant 0 : i32
    %c0_i32_0 = arith.constant 0 : i32
    %c0_i32_1 = arith.constant 0 : i32
    return %c0_i32, %c0_i32_0 : i32, i32
  }
  func.func @transform_4(%arg0: i32) -> (i32, i32) {
    %c0_i32 = arith.constant 0 : i32
    %c0_i32_0 = arith.constant 0 : i32
    %c0_i32_1 = arith.constant 0 : i32
    return %c0_i32, %c0_i32_0 : i32, i32
  }
  func.func @transform_5(%arg0: i32) -> (i32, i32) {
    %c0_i32 = arith.constant 0 : i32
    %c0_i32_0 = arith.constant 0 : i32
    %c0_i32_1 = arith.constant 0 : i32
    return %c0_i32, %c0_i32_0 : i32, i32
  }
  func.func @transform_6(%arg0: i32) -> (i32, i32) {
    %c0_i32 = arith.constant 0 : i32
    %c0_i32_0 = arith.constant 0 : i32
    %c0_i32_1 = arith.constant 0 : i32
    return %c0_i32, %c0_i32_0 : i32, i32
  }
  func.func @transform_7(%arg0: i32) -> (i32, i32, i32) {
    %c0_i32 = arith.constant 0 : i32
    %c0_i32_0 = arith.constant 0 : i32
    %c0_i32_1 = arith.constant 0 : i32
    return %arg0, %c0_i32, %c0_i32_0 : i32, i32, i32
  }
}

</mosaic_0001>

<llo_original>
// kernel: discriminator_forward.1
$region0: #{discriminator_forward.1}
  #allocation0 [shape = 'u32[]', space=smem, size = 0x4, offset = 0x4, fixed_abs, tag = 'smem constant byte address 0x4 - core index']
  #allocation1 [shape = 'u32[144,128]{1,0:T(1,128)}', space=vmem, size = 0x12000, scoped, tag = 'internal scratch']
  #allocation2 [shape = 'f32[1,1]{1,0:T(1,128)S(1)}', space=vmem, size = 0x200, scoped, tag = 'scoped memory for discriminator_forward.1']
  %s0 = inlined_call_operand.vmem [shape: f32[8,144], index: 0, kind: input, shape index: {}]
  %s1 = inlined_call_operand.hbm [shape: bf16[144,512], index: 1, kind: input, shape index: {}]
  %s2 = inlined_call_operand.vmem [shape: f32[1,512], index: 2, kind: input, shape index: {}]
  %s3 = inlined_call_operand.hbm [shape: bf16[512,256], index: 3, kind: input, shape index: {}]
  %s4 = inlined_call_operand.vmem [shape: f32[1,256], index: 4, kind: input, shape index: {}]
  %s5 = inlined_call_operand.vmem [shape: bf16[1,256], index: 5, kind: input, shape index: {}]
  %s6 = inlined_call_operand.<no memory space> [shape: f32[1,1], index: 6, kind: input, shape index: {}]
  %s7 = inlined_call_operand.vmem [shape: f32[1,1,8], index: 7, kind: output, shape index: {}]
  %s8 = sld [smem:[#allocation0]]
  $region46: #{discriminator_forward.1} parent=0
    _
  %s10 = ssub.s32 1, %s8
  %s11 = scalar_select 0, %s10, %s8
  %v12 = vstv %s6
  %13 = vst [vmem:[#allocation2] sm:$0x1] %v12
  $region1: #{discriminator_forward.1} parent=0
    #allocation3 [shape = 'u8[147456]{0}', space=vmem, size = 0x24000, scoped, tag = 'input window, operand 1, single buffered']
    #allocation4 [shape = 's32[1]{0}', space=sflag, size = 0x4, scoped, tag = 'scoped memory for discriminator_forward.1']
    #allocation5 [shape = 'u8[262144]{0}', space=vmem, size = 0x40000, scoped, tag = 'input window, operand 3, single buffered']
    #allocation6 [shape = 's32[1]{0}', space=sflag, size = 0x4, scoped, tag = 'scoped memory for discriminator_forward.1']
    %14 = vsyncpa [#allocation4], 0
    %15 = vsyncpa [#allocation6], 0
    // Predicated region
    $region2: #{discriminator_forward.1} parent=1 // pred_check
      _
    $region3: #{discriminator_forward.1} parent=1 // pred_check_branch
      %17 = sbr.rel (0) target = $region5
    $region4: #{discriminator_forward.1} parent=1 // pred_region
      _
    $region5: #{discriminator_forward.1} parent=1 // pred_fallthru
      _
    // Predicated region
    $region6: #{discriminator_forward.1} parent=1 // pred_check
      _
    $region7: #{discriminator_forward.1} parent=1 // pred_check_branch
      %19 = sbr.rel (0) target = $region9
    $region8: #{discriminator_forward.1} parent=1 // pred_region
      %s21 = ssub.s32 4608, 4608
      %22 = vsyncadd [#allocation4], %s21
      %s23 = sshll.u32 [#allocation3], 4
      %s24 = int_to_ptr.vmem [resolvable:$true] %s23
      %29 = dma.hbm_to_vmem [thread:$0]  %s1, 4608, %s24, [#allocation4], 256, 256, 16
    $region9: #{discriminator_forward.1} parent=1 // pred_fallthru
      _
    // Predicated region
    $region10: #{discriminator_forward.1} parent=1 // pred_check
      _
    $region11: #{discriminator_forward.1} parent=1 // pred_check_branch
      %31 = sbr.rel (0) target = $region13
    $region12: #{discriminator_forward.1} parent=1 // pred_region
      _
    $region13: #{discriminator_forward.1} parent=1 // pred_fallthru
      _
    // Predicated region
    $region14: #{discriminator_forward.1} parent=1 // pred_check
      _
    $region15: #{discriminator_forward.1} parent=1 // pred_check_branch
      %33 = sbr.rel (0) target = $region17
    $region16: #{discriminator_forward.1} parent=1 // pred_region
      %s35 = ssub.s32 8192, 8192
      %36 = vsyncadd [#allocation6], %s35
      %s37 = sshll.u32 [#allocation5], 4
      %s38 = int_to_ptr.vmem [resolvable:$true] %s37
      %43 = dma.hbm_to_vmem [thread:$0]  %s3, 8192, %s38, [#allocation6], 128, 128, 8
    $region17: #{discriminator_forward.1} parent=1 // pred_fallthru
      _
    // Predicated region
    $region18: #{discriminator_forward.1} parent=1 // pred_check
      _
    $region19: #{discriminator_forward.1} parent=1 // pred_check_branch
      %45 = sbr.rel (0) target = $region21
    $region20: #{discriminator_forward.1} parent=1 // pred_region
      _
    $region21: #{discriminator_forward.1} parent=1 // pred_fallthru
      _
    // Predicated region
    $region22: #{discriminator_forward.1} parent=1 // pred_check
      _
    $region23: #{discriminator_forward.1} parent=1 // pred_check_branch
      %47 = sbr.rel (0) target = $region25
    $region24: #{discriminator_forward.1} parent=1 // pred_region
      _
    $region25: #{discriminator_forward.1} parent=1 // pred_fallthru
      _
    // Predicated region
    $region26: #{discriminator_forward.1} parent=1 // pred_check
      _
    $region27: #{discriminator_forward.1} parent=1 // pred_check_branch
      %49 = sbr.rel (0) target = $region29
    $region28: #{discriminator_forward.1} parent=1 // pred_region
      _
    $region29: #{discriminator_forward.1} parent=1 // pred_fallthru
      _
    // Predicated region
    $region30: #{discriminator_forward.1} parent=1 // pred_check
      _
    $region31: #{discriminator_forward.1} parent=1 // pred_check_branch
      %51 = sbr.rel (0) target = $region33
    $region32: #{discriminator_forward.1} parent=1 // pred_region
      %52 = dma.done [#allocation4], 4608
    $region33: #{discriminator_forward.1} parent=1 // pred_fallthru
      _
    // Predicated region
    $region34: #{discriminator_forward.1} parent=1 // pred_check
      _
    $region35: #{discriminator_forward.1} parent=1 // pred_check_branch
      %54 = sbr.rel (0) target = $region37
    $region36: #{discriminator_forward.1} parent=1 // pred_region
      %55 = dma.done [#allocation6], 8192
    $region37: #{discriminator_forward.1} parent=1 // pred_fallthru
      _
    %v57 = vld [vmem:[%s0] sm:$0xff]
    %v58 = vld [vmem:[%s0 + $0x8] sm:$0xff]
    %v59 = vpack.c.bf16 %v57, %v57
    %v60 = vpack.c.bf16 %v58, %v58
    %v61 = vld [vmem:[#allocation3] sm:$0xff]
    %v62 = vld [vmem:[#allocation3 + $0x8] sm:$0xff]
    %v63 = vld [vmem:[#allocation3 + $0x10] sm:$0xff]
    %v64 = vld [vmem:[#allocation3 + $0x18] sm:$0xff]
    %v65 = vld [vmem:[#allocation3 + $0x20] sm:$0xff]
    %v66 = vld [vmem:[#allocation3 + $0x28] sm:$0xff]
    %v67 = vld [vmem:[#allocation3 + $0x30] sm:$0xff]
    %v68 = vld [vmem:[#allocation3 + $0x38] sm:$0xff]
    %v69 = vld [vmem:[#allocation3 + $0x40] sm:$0xff]
    %v70 = vld [vmem:[#allocation3 + $0x48] sm:$0xff]
    %v71 = vld [vmem:[#allocation3 + $0x50] sm:$0xff]
    %v72 = vld [vmem:[#allocation3 + $0x58] sm:$0xff]
    %v73 = vld [vmem:[#allocation3 + $0x60] sm:$0xff]
    %v74 = vld [vmem:[#allocation3 + $0x68] sm:$0xff]
    %v75 = vld [vmem:[#allocation3 + $0x70] sm:$0xff]
    %v76 = vld [vmem:[#allocation3 + $0x78] sm:$0xff]
    %v77 = vld [vmem:[#allocation3 + $0x80] sm:$0xff]
    %v78 = vld [vmem:[#allocation3 + $0x88] sm:$0xff]
    %v79 = vld [vmem:[#allocation3 + $0x90] sm:$0xff]
    %v80 = vld [vmem:[#allocation3 + $0x98] sm:$0xff]
    %v81 = vld [vmem:[#allocation3 + $0xa0] sm:$0xff]
    %v82 = vld [vmem:[#allocation3 + $0xa8] sm:$0xff]
    %v83 = vld [vmem:[#allocation3 + $0xb0] sm:$0xff]
    %v84 = vld [vmem:[#allocation3 + $0xb8] sm:$0xff]
    %v85 = vld [vmem:[#allocation3 + $0xc0] sm:$0xff]
    %v86 = vld [vmem:[#allocation3 + $0xc8] sm:$0xff]
    %v87 = vld [vmem:[#allocation3 + $0xd0] sm:$0xff]
    %v88 = vld [vmem:[#allocation3 + $0xd8] sm:$0xff]
    %v89 = vld [vmem:[#allocation3 + $0xe0] sm:$0xff]
    %v90 = vld [vmem:[#allocation3 + $0xe8] sm:$0xff]
    %v91 = vld [vmem:[#allocation3 + $0xf0] sm:$0xff]
    %v92 = vld [vmem:[#allocation3 + $0xf8] sm:$0xff]
    %v93 = vld [vmem:[#allocation3 + $0x100] sm:$0xff]
    %v94 = vld [vmem:[#allocation3 + $0x108] sm:$0xff]
    %v95 = vld [vmem:[#allocation3 + $0x110] sm:$0xff]
    %v96 = vld [vmem:[#allocation3 + $0x118] sm:$0xff]
    %v97 = vld [vmem:[%s2] sm:$0xf]
    %v99 = vlaneseq
    %v100 = vshrl.u32 %v99, 7
    %v101 = vsub.s32 0, %v100
    %v102 = vrot.slane %v97, %v101
    %v103 = vlaneseq
    %v104 = vshrl.u32 %v103, 7
    %v105 = vsub.s32 1, %v104
    %v106 = vrot.slane %v97, %v105
    %v107 = vlaneseq
    %v108 = vshrl.u32 %v107, 7
    %v109 = vsub.s32 2, %v108
    %v110 = vrot.slane %v97, %v109
    %v111 = vlaneseq
    %v112 = vshrl.u32 %v111, 7
    %v113 = vsub.s32 3, %v112
    %v114 = vrot.slane %v97, %v113
    %v155 = vunpack.c.l.b16 %v61
    %v156 = vunpack.c.h.b16 %v61
    %v157 = vunpack.c.l.b16 %v62
    %v158 = vunpack.c.h.b16 %v62
    %v159 = vunpack.c.l.b16 %v63
    %v160 = vunpack.c.h.b16 %v63
    %v161 = vunpack.c.l.b16 %v64
    %v162 = vunpack.c.h.b16 %v64
    %v163 = vunpack.c.l.b16 %v65
    %v164 = vunpack.c.h.b16 %v65
    %v165 = vunpack.c.l.b16 %v66
    %v166 = vunpack.c.h.b16 %v66
    %v167 = vunpack.c.l.b16 %v67
    %v168 = vunpack.c.h.b16 %v67
    %v169 = vunpack.c.l.b16 %v68
    %v170 = vunpack.c.h.b16 %v68
    %v171 = vunpack.c.l.b16 %v69
    %v172 = vunpack.c.h.b16 %v69
    %v173 = vunpack.c.l.b16 %v70
    %v174 = vunpack.c.h.b16 %v70
    %v175 = vunpack.c.l.b16 %v71
    %v176 = vunpack.c.h.b16 %v71
    %v177 = vunpack.c.l.b16 %v72
    %v178 = vunpack.c.h.b16 %v72
    %v179 = vunpack.c.l.b16 %v73
    %v180 = vunpack.c.h.b16 %v73
    %v181 = vunpack.c.l.b16 %v74
    %v182 = vunpack.c.h.b16 %v74
    %v183 = vunpack.c.l.b16 %v75
    %v184 = vunpack.c.h.b16 %v75
    %v185 = vunpack.c.l.b16 %v76
    %v186 = vunpack.c.h.b16 %v76
    %v187 = vunpack.c.l.b16 %v77
    %v188 = vunpack.c.h.b16 %v77
    %v189 = vunpack.c.l.b16 %v78
    %v190 = vunpack.c.h.b16 %v78
    %v191 = vunpack.c.l.b16 %v79
    %v192 = vunpack.c.h.b16 %v79
    %v193 = vunpack.c.l.b16 %v80
    %v194 = vunpack.c.h.b16 %v80
    %v195 = vunpack.c.l.b16 %v81
    %v196 = vunpack.c.h.b16 %v81
    %v197 = vunpack.c.l.b16 %v82
    %v198 = vunpack.c.h.b16 %v82
    %v199 = vunpack.c.l.b16 %v83
    %v200 = vunpack.c.h.b16 %v83
    %v201 = vunpack.c.l.b16 %v84
    %v202 = vunpack.c.h.b16 %v84
    %v203 = vunpack.c.l.b16 %v85
    %v204 = vunpack.c.h.b16 %v85
    %v205 = vunpack.c.l.b16 %v86
    %v206 = vunpack.c.h.b16 %v86
    %v207 = vunpack.c.l.b16 %v87
    %v208 = vunpack.c.h.b16 %v87
    %v209 = vunpack.c.l.b16 %v88
    %v210 = vunpack.c.h.b16 %v88
    %v211 = vunpack.c.l.b16 %v89
    %v212 = vunpack.c.h.b16 %v89
    %v213 = vunpack.c.l.b16 %v90
    %v214 = vunpack.c.h.b16 %v90
    %v215 = vunpack.c.l.b16 %v91
    %v216 = vunpack.c.h.b16 %v91
    %v217 = vunpack.c.l.b16 %v92
    %v218 = vunpack.c.h.b16 %v92
    %v219 = vunpack.c.l.b16 %v93
    %v220 = vunpack.c.h.b16 %v93
    %v221 = vunpack.c.l.b16 %v94
    %v222 = vunpack.c.h.b16 %v94
    %v223 = vunpack.c.l.b16 %v95
    %v224 = vunpack.c.h.b16 %v95
    %v225 = vunpack.c.l.b16 %v96
    %v226 = vunpack.c.h.b16 %v96
    %v227 = vpack.c.b16 %v159, %v155
    %v228 = vpack.c.b16 %v160, %v156
    %v229 = vpack.c.b16 %v161, %v157
    %v230 = vpack.c.b16 %v162, %v158
    %v231 = vpack.c.b16 %v167, %v163
    %v232 = vpack.c.b16 %v168, %v164
    %v233 = vpack.c.b16 %v169, %v165
    %v234 = vpack.c.b16 %v170, %v166
    %v235 = vpack.c.b16 %v175, %v171
    %v236 = vpack.c.b16 %v176, %v172
    %v237 = vpack.c.b16 %v177, %v173
    %v238 = vpack.c.b16 %v178, %v174
    %v239 = vpack.c.b16 %v183, %v179
    %v240 = vpack.c.b16 %v184, %v180
    %v241 = vpack.c.b16 %v185, %v181
    %v242 = vpack.c.b16 %v186, %v182
    %v243 = vpack.c.b16 %v191, %v187
    %v244 = vpack.c.b16 %v192, %v188
    %v245 = vpack.c.b16 %v193, %v189
    %v246 = vpack.c.b16 %v194, %v190
    %v247 = vpack.c.b16 %v199, %v195
    %v248 = vpack.c.b16 %v200, %v196
    %v249 = vpack.c.b16 %v201, %v197
    %v250 = vpack.c.b16 %v202, %v198
    %v251 = vpack.c.b16 %v207, %v203
    %v252 = vpack.c.b16 %v208, %v204
    %v253 = vpack.c.b16 %v209, %v205
    %v254 = vpack.c.b16 %v210, %v206
    %v255 = vpack.c.b16 %v215, %v211
    %v256 = vpack.c.b16 %v216, %v212
    %v257 = vpack.c.b16 %v217, %v213
    %v258 = vpack.c.b16 %v218, %v214
    %v259 = vpack.c.b16 %v223, %v219
    %v260 = vpack.c.b16 %v224, %v220
    %v261 = vpack.c.b16 %v225, %v221
    %v262 = vpack.c.b16 %v226, %v222
    %vm299 = vcmask 130048
    %v301 = vsel %vm299, %v60, 0
    %303 = vmatprep.subr.bf16.mxu0 %v228
    %304 = vmatpush1.bf16.msra.mxu0 %v227
    %305 = vmatprep.subr.bf16.mxu0 %v232
    %306 = vmatpush1.bf16.msra.mxu0 %v231
    %307 = vmatprep.subr.bf16.mxu0 %v236
    %308 = vmatpush1.bf16.msra.mxu0 %v235
    %309 = vmatprep.subr.bf16.mxu0 %v240
    %310 = vmatpush1.bf16.msra.mxu0 %v239
    %311 = vmatprep.subr.bf16.mxu0 %v244
    %312 = vmatpush1.bf16.msra.mxu0 %v243
    %313 = vmatprep.subr.bf16.mxu0 %v248
    %314 = vmatpush1.bf16.msra.mxu0 %v247
    %315 = vmatprep.subr.bf16.mxu0 %v252
    %316 = vmatpush1.bf16.msra.mxu0 %v251
    %317 = vmatprep.subr.bf16.mxu0 %v256
    %318 = vmatpush1.bf16.msra.mxu0 %v255
    %319 = vmatprep.subr.bf16.mxu0 %v260
    %320 = vmatpush1.bf16.msra.mxu0 %v259
    %321 = vmatprep.subr.bf16.mxu0 0
    %322 = vmatpush1.bf16.msra.mxu0 0
    %323 = vmatprep.subr.bf16.mxu0 0
    %324 = vmatpush1.bf16.msra.mxu0 0
    %325 = vmatprep.subr.bf16.mxu0 0
    %326 = vmatpush1.bf16.msra.mxu0 0
    %327 = vmatprep.subr.bf16.mxu0 0
    %328 = vmatpush1.bf16.msra.mxu0 0
    %329 = vmatprep.subr.bf16.mxu0 0
    %330 = vmatpush1.bf16.msra.mxu0 0
    %331 = vmatprep.subr.bf16.mxu0 0
    %332 = vmatpush1.bf16.msra.mxu0 0
    %333 = vmatprep.subr.bf16.mxu0 0
    %334 = vmatpush1.bf16.msra.mxu0 0
    %335 = vmatprep.mubr.bf16.mxu0 %v301
    %336 = vmatmul.mubr.bf16.gmra.mrb[0].mxu0 %v59
    %v337 = vpop.f32.mrb[0].mxu0
    %v338 = vadd.f32 %v102, %v337
    %v339 = vpop.f32.mrb[0].mxu0
    %v340 = vadd.f32 %v106, %v339
    %v341 = vpop.f32.mrb[0].mxu0
    %v342 = vpop.f32.mrb[0].mxu0
    %343 = vdwg.mxu0
    %344 = vmatprep.subr.bf16.mxu0 %v230
    %345 = vmatpush1.bf16.msra.mxu0 %v229
    %346 = vmatprep.subr.bf16.mxu0 %v234
    %347 = vmatpush1.bf16.msra.mxu0 %v233
    %348 = vmatprep.subr.bf16.mxu0 %v238
    %349 = vmatpush1.bf16.msra.mxu0 %v237
    %350 = vmatprep.subr.bf16.mxu0 %v242
    %351 = vmatpush1.bf16.msra.mxu0 %v241
    %352 = vmatprep.subr.bf16.mxu0 %v246
    %353 = vmatpush1.bf16.msra.mxu0 %v245
    %354 = vmatprep.subr.bf16.mxu0 %v250
    %355 = vmatpush1.bf16.msra.mxu0 %v249
    %356 = vmatprep.subr.bf16.mxu0 %v254
    %357 = vmatpush1.bf16.msra.mxu0 %v253
    %358 = vmatprep.subr.bf16.mxu0 %v258
    %359 = vmatpush1.bf16.msra.mxu0 %v257
    %360 = vmatprep.subr.bf16.mxu0 %v262
    %361 = vmatpush1.bf16.msra.mxu0 %v261
    %362 = vmatprep.subr.bf16.mxu0 0
    %363 = vmatpush1.bf16.msra.mxu0 0
    %364 = vmatprep.subr.bf16.mxu0 0
    %365 = vmatpush1.bf16.msra.mxu0 0
    %366 = vmatprep.subr.bf16.mxu0 0
    %367 = vmatpush1.bf16.msra.mxu0 0
    %368 = vmatprep.subr.bf16.mxu0 0
    %369 = vmatpush1.bf16.msra.mxu0 0
    %370 = vmatprep.subr.bf16.mxu0 0
    %371 = vmatpush1.bf16.msra.mxu0 0
    %372 = vmatprep.subr.bf16.mxu0 0
    %373 = vmatpush1.bf16.msra.mxu0 0
    %374 = vmatprep.subr.bf16.mxu0 0
    %375 = vmatpush1.bf16.msra.mxu0 0
    %376 = vmatprep.mubr.bf16.mxu0 %v301
    %377 = vmatmul.mubr.bf16.gmra.mrb[0].mxu0 %v59
    %v378 = vpop.f32.mrb[0].mxu0
    %v379 = vadd.f32 %v110, %v378
    %v380 = vpop.f32.mrb[0].mxu0
    %v381 = vadd.f32 %v114, %v380
    %v382 = vpop.f32.mrb[0].mxu0
    %v383 = vpop.f32.mrb[0].mxu0
    %384 = vdwg.mxu0
    %vm385 = vcmp.gt.f32.partialorder %v338, 0.0
    %vm386 = vcmp.gt.f32.partialorder %v340, 0.0
    %vm387 = vcmp.gt.f32.partialorder %v379, 0.0
    %vm388 = vcmp.gt.f32.partialorder %v381, 0.0
    %v389 = vmul.f32 %v338, 0.2
    %v390 = vmul.f32 %v340, 0.2
    %v391 = vmul.f32 %v379, 0.2
    %v392 = vmul.f32 %v381, 0.2
    %v393 = vsel %vm385, %v338, %v389
    %v394 = vsel %vm386, %v340, %v390
    %v395 = vsel %vm387, %v379, %v391
    %v396 = vsel %vm388, %v381, %v392
    %v397 = vpack.c.bf16 %v393, %v393
    %v398 = vpack.c.bf16 %v394, %v394
    %v399 = vpack.c.bf16 %v395, %v395
    %v400 = vpack.c.bf16 %v396, %v396
    %v401 = vld [vmem:[#allocation5] sm:$0xff]
    %v402 = vld [vmem:[#allocation5 + $0x8] sm:$0xff]
    %v403 = vld [vmem:[#allocation5 + $0x10] sm:$0xff]
    %v404 = vld [vmem:[#allocation5 + $0x18] sm:$0xff]
    %v405 = vld [vmem:[#allocation5 + $0x20] sm:$0xff]
    %v406 = vld [vmem:[#allocation5 + $0x28] sm:$0xff]
    %v407 = vld [vmem:[#allocation5 + $0x30] sm:$0xff]
    %v408 = vld [vmem:[#allocation5 + $0x38] sm:$0xff]
    %v409 = vld [vmem:[#allocation5 + $0x40] sm:$0xff]
    %v410 = vld [vmem:[#allocation5 + $0x48] sm:$0xff]
    %v411 = vld [vmem:[#allocation5 + $0x50] sm:$0xff]
    %v412 = vld [vmem:[#allocation5 + $0x58] sm:$0xff]
    %v413 = vld [vmem:[#allocation5 + $0x60] sm:$0xff]
    %v414 = vld [vmem:[#allocation5 + $0x68] sm:$0xff]
    %v415 = vld [vmem:[#allocation5 + $0x70] sm:$0xff]
    %v416 = vld [vmem:[#allocation5 + $0x78] sm:$0xff]
    %v417 = vld [vmem:[#allocation5 + $0x80] sm:$0xff]
    %v418 = vld [vmem:[#allocation5 + $0x88] sm:$0xff]
    %v419 = vld [vmem:[#allocation5 + $0x90] sm:$0xff]
    %v420 = vld [vmem:[#allocation5 + $0x98] sm:$0xff]
    %v421 = vld [vmem:[#allocation5 + $0xa0] sm:$0xff]
    %v422 = vld [vmem:[#allocation5 + $0xa8] sm:$0xff]
    %v423 = vld [vmem:[#allocation5 + $0xb0] sm:$0xff]
    %v424 = vld [vmem:[#allocation5 + $0xb8] sm:$0xff]
    %v425 = vld [vmem:[#allocation5 + $0xc0] sm:$0xff]
    %v426 = vld [vmem:[#allocation5 + $0xc8] sm:$0xff]
    %v427 = vld [vmem:[#allocation5 + $0xd0] sm:$0xff]
    %v428 = vld [vmem:[#allocation5 + $0xd8] sm:$0xff]
    %v429 = vld [vmem:[#allocation5 + $0xe0] sm:$0xff]
    %v430 = vld [vmem:[#allocation5 + $0xe8] sm:$0xff]
    %v431 = vld [vmem:[#allocation5 + $0xf0] sm:$0xff]
    %v432 = vld [vmem:[#allocation5 + $0xf8] sm:$0xff]
    %v433 = vld [vmem:[#allocation5 + $0x100] sm:$0xff]
    %v434 = vld [vmem:[#allocation5 + $0x108] sm:$0xff]
    %v435 = vld [vmem:[#allocation5 + $0x110] sm:$0xff]
    %v436 = vld [vmem:[#allocation5 + $0x118] sm:$0xff]
    %v437 = vld [vmem:[#allocation5 + $0x120] sm:$0xff]
    %v438 = vld [vmem:[#allocation5 + $0x128] sm:$0xff]
    %v439 = vld [vmem:[#allocation5 + $0x130] sm:$0xff]
    %v440 = vld [vmem:[#allocation5 + $0x138] sm:$0xff]
    %v441 = vld [vmem:[#allocation5 + $0x140] sm:$0xff]
    %v442 = vld [vmem:[#allocation5 + $0x148] sm:$0xff]
    %v443 = vld [vmem:[#allocation5 + $0x150] sm:$0xff]
    %v444 = vld [vmem:[#allocation5 + $0x158] sm:$0xff]
    %v445 = vld [vmem:[#allocation5 + $0x160] sm:$0xff]
    %v446 = vld [vmem:[#allocation5 + $0x168] sm:$0xff]
    %v447 = vld [vmem:[#allocation5 + $0x170] sm:$0xff]
    %v448 = vld [vmem:[#allocation5 + $0x178] sm:$0xff]
    %v449 = vld [vmem:[#allocation5 + $0x180] sm:$0xff]
    %v450 = vld [vmem:[#allocation5 + $0x188] sm:$0xff]
    %v451 = vld [vmem:[#allocation5 + $0x190] sm:$0xff]
    %v452 = vld [vmem:[#allocation5 + $0x198] sm:$0xff]
    %v453 = vld [vmem:[#allocation5 + $0x1a0] sm:$0xff]
    %v454 = vld [vmem:[#allocation5 + $0x1a8] sm:$0xff]
    %v455 = vld [vmem:[#allocation5 + $0x1b0] sm:$0xff]
    %v456 = vld [vmem:[#allocation5 + $0x1b8] sm:$0xff]
    %v457 = vld [vmem:[#allocation5 + $0x1c0] sm:$0xff]
    %v458 = vld [vmem:[#allocation5 + $0x1c8] sm:$0xff]
    %v459 = vld [vmem:[#allocation5 + $0x1d0] sm:$0xff]
    %v460 = vld [vmem:[#allocation5 + $0x1d8] sm:$0xff]
    %v461 = vld [vmem:[#allocation5 + $0x1e0] sm:$0xff]
    %v462 = vld [vmem:[#allocation5 + $0x1e8] sm:$0xff]
    %v463 = vld [vmem:[#allocation5 + $0x1f0] sm:$0xff]
    %v464 = vld [vmem:[#allocation5 + $0x1f8] sm:$0xff]
    %v465 = vld [vmem:[%s4] sm:$0x3]
    %v467 = vlaneseq
    %v468 = vshrl.u32 %v467, 7
    %v469 = vsub.s32 0, %v468
    %v470 = vrot.slane %v465, %v469
    %v471 = vlaneseq
    %v472 = vshrl.u32 %v471, 7
    %v473 = vsub.s32 1, %v472
    %v474 = vrot.slane %v465, %v473
    %v541 = vunpack.c.l.b16 %v401
    %v542 = vunpack.c.h.b16 %v401
    %v543 = vunpack.c.l.b16 %v402
    %v544 = vunpack.c.h.b16 %v402
    %v545 = vunpack.c.l.b16 %v403
    %v546 = vunpack.c.h.b16 %v403
    %v547 = vunpack.c.l.b16 %v404
    %v548 = vunpack.c.h.b16 %v404
    %v549 = vunpack.c.l.b16 %v405
    %v550 = vunpack.c.h.b16 %v405
    %v551 = vunpack.c.l.b16 %v406
    %v552 = vunpack.c.h.b16 %v406
    %v553 = vunpack.c.l.b16 %v407
    %v554 = vunpack.c.h.b16 %v407
    %v555 = vunpack.c.l.b16 %v408
    %v556 = vunpack.c.h.b16 %v408
    %v557 = vunpack.c.l.b16 %v409
    %v558 = vunpack.c.h.b16 %v409
    %v559 = vunpack.c.l.b16 %v410
    %v560 = vunpack.c.h.b16 %v410
    %v561 = vunpack.c.l.b16 %v411
    %v562 = vunpack.c.h.b16 %v411
    %v563 = vunpack.c.l.b16 %v412
    %v564 = vunpack.c.h.b16 %v412
    %v565 = vunpack.c.l.b16 %v413
    %v566 = vunpack.c.h.b16 %v413
    %v567 = vunpack.c.l.b16 %v414
    %v568 = vunpack.c.h.b16 %v414
    %v569 = vunpack.c.l.b16 %v415
    %v570 = vunpack.c.h.b16 %v415
    %v571 = vunpack.c.l.b16 %v416
    %v572 = vunpack.c.h.b16 %v416
    %v573 = vunpack.c.l.b16 %v417
    %v574 = vunpack.c.h.b16 %v417
    %v575 = vunpack.c.l.b16 %v418
    %v576 = vunpack.c.h.b16 %v418
    %v577 = vunpack.c.l.b16 %v419
    %v578 = vunpack.c.h.b16 %v419
    %v579 = vunpack.c.l.b16 %v420
    %v580 = vunpack.c.h.b16 %v420
    %v581 = vunpack.c.l.b16 %v421
    %v582 = vunpack.c.h.b16 %v421
    %v583 = vunpack.c.l.b16 %v422
    %v584 = vunpack.c.h.b16 %v422
    %v585 = vunpack.c.l.b16 %v423
    %v586 = vunpack.c.h.b16 %v423
    %v587 = vunpack.c.l.b16 %v424
    %v588 = vunpack.c.h.b16 %v424
    %v589 = vunpack.c.l.b16 %v425
    %v590 = vunpack.c.h.b16 %v425
    %v591 = vunpack.c.l.b16 %v426
    %v592 = vunpack.c.h.b16 %v426
    %v593 = vunpack.c.l.b16 %v427
    %v594 = vunpack.c.h.b16 %v427
    %v595 = vunpack.c.l.b16 %v428
    %v596 = vunpack.c.h.b16 %v428
    %v597 = vunpack.c.l.b16 %v429
    %v598 = vunpack.c.h.b16 %v429
    %v599 = vunpack.c.l.b16 %v430
    %v600 = vunpack.c.h.b16 %v430
    %v601 = vunpack.c.l.b16 %v431
    %v602 = vunpack.c.h.b16 %v431
    %v603 = vunpack.c.l.b16 %v432
    %v604 = vunpack.c.h.b16 %v432
    %v605 = vunpack.c.l.b16 %v433
    %v606 = vunpack.c.h.b16 %v433
    %v607 = vunpack.c.l.b16 %v434
    %v608 = vunpack.c.h.b16 %v434
    %v609 = vunpack.c.l.b16 %v435
    %v610 = vunpack.c.h.b16 %v435
    %v611 = vunpack.c.l.b16 %v436
    %v612 = vunpack.c.h.b16 %v436
    %v613 = vunpack.c.l.b16 %v437
    %v614 = vunpack.c.h.b16 %v437
    %v615 = vunpack.c.l.b16 %v438
    %v616 = vunpack.c.h.b16 %v438
    %v617 = vunpack.c.l.b16 %v439
    %v618 = vunpack.c.h.b16 %v439
    %v619 = vunpack.c.l.b16 %v440
    %v620 = vunpack.c.h.b16 %v440
    %v621 = vunpack.c.l.b16 %v441
    %v622 = vunpack.c.h.b16 %v441
    %v623 = vunpack.c.l.b16 %v442
    %v624 = vunpack.c.h.b16 %v442
    %v625 = vunpack.c.l.b16 %v443
    %v626 = vunpack.c.h.b16 %v443
    %v627 = vunpack.c.l.b16 %v444
    %v628 = vunpack.c.h.b16 %v444
    %v629 = vunpack.c.l.b16 %v445
    %v630 = vunpack.c.h.b16 %v445
    %v631 = vunpack.c.l.b16 %v446
    %v632 = vunpack.c.h.b16 %v446
    %v633 = vunpack.c.l.b16 %v447
    %v634 = vunpack.c.h.b16 %v447
    %v635 = vunpack.c.l.b16 %v448
    %v636 = vunpack.c.h.b16 %v448
    %v637 = vunpack.c.l.b16 %v449
    %v638 = vunpack.c.h.b16 %v449
    %v639 = vunpack.c.l.b16 %v450
    %v640 = vunpack.c.h.b16 %v450
    %v641 = vunpack.c.l.b16 %v451
    %v642 = vunpack.c.h.b16 %v451
    %v643 = vunpack.c.l.b16 %v452
    %v644 = vunpack.c.h.b16 %v452
    %v645 = vunpack.c.l.b16 %v453
    %v646 = vunpack.c.h.b16 %v453
    %v647 = vunpack.c.l.b16 %v454
    %v648 = vunpack.c.h.b16 %v454
    %v649 = vunpack.c.l.b16 %v455
    %v650 = vunpack.c.h.b16 %v455
    %v651 = vunpack.c.l.b16 %v456
    %v652 = vunpack.c.h.b16 %v456
    %v653 = vunpack.c.l.b16 %v457
    %v654 = vunpack.c.h.b16 %v457
    %v655 = vunpack.c.l.b16 %v458
    %v656 = vunpack.c.h.b16 %v458
    %v657 = vunpack.c.l.b16 %v459
    %v658 = vunpack.c.h.b16 %v459
    %v659 = vunpack.c.l.b16 %v460
    %v660 = vunpack.c.h.b16 %v460
    %v661 = vunpack.c.l.b16 %v461
    %v662 = vunpack.c.h.b16 %v461
    %v663 = vunpack.c.l.b16 %v462
    %v664 = vunpack.c.h.b16 %v462
    %v665 = vunpack.c.l.b16 %v463
    %v666 = vunpack.c.h.b16 %v463
    %v667 = vunpack.c.l.b16 %v464
    %v668 = vunpack.c.h.b16 %v464
    %v669 = vpack.c.b16 %v543, %v541
    %v670 = vpack.c.b16 %v544, %v542
    %v671 = vpack.c.b16 %v547, %v545
    %v672 = vpack.c.b16 %v548, %v546
    %v673 = vpack.c.b16 %v551, %v549
    %v674 = vpack.c.b16 %v552, %v550
    %v675 = vpack.c.b16 %v555, %v553
    %v676 = vpack.c.b16 %v556, %v554
    %v677 = vpack.c.b16 %v559, %v557
    %v678 = vpack.c.b16 %v560, %v558
    %v679 = vpack.c.b16 %v563, %v561
    %v680 = vpack.c.b16 %v564, %v562
    %v681 = vpack.c.b16 %v567, %v565
    %v682 = vpack.c.b16 %v568, %v566
    %v683 = vpack.c.b16 %v571, %v569
    %v684 = vpack.c.b16 %v572, %v570
    %v685 = vpack.c.b16 %v575, %v573
    %v686 = vpack.c.b16 %v576, %v574
    %v687 = vpack.c.b16 %v579, %v577
    %v688 = vpack.c.b16 %v580, %v578
    %v689 = vpack.c.b16 %v583, %v581
    %v690 = vpack.c.b16 %v584, %v582
    %v691 = vpack.c.b16 %v587, %v585
    %v692 = vpack.c.b16 %v588, %v586
    %v693 = vpack.c.b16 %v591, %v589
    %v694 = vpack.c.b16 %v592, %v590
    %v695 = vpack.c.b16 %v595, %v593
    %v696 = vpack.c.b16 %v596, %v594
    %v697 = vpack.c.b16 %v599, %v597
    %v698 = vpack.c.b16 %v600, %v598
    %v699 = vpack.c.b16 %v603, %v601
    %v700 = vpack.c.b16 %v604, %v602
    %v701 = vpack.c.b16 %v607, %v605
    %v702 = vpack.c.b16 %v608, %v606
    %v703 = vpack.c.b16 %v611, %v609
    %v704 = vpack.c.b16 %v612, %v610
    %v705 = vpack.c.b16 %v615, %v613
    %v706 = vpack.c.b16 %v616, %v614
    %v707 = vpack.c.b16 %v619, %v617
    %v708 = vpack.c.b16 %v620, %v618
    %v709 = vpack.c.b16 %v623, %v621
    %v710 = vpack.c.b16 %v624, %v622
    %v711 = vpack.c.b16 %v627, %v625
    %v712 = vpack.c.b16 %v628, %v626
    %v713 = vpack.c.b16 %v631, %v629
    %v714 = vpack.c.b16 %v632, %v630
    %v715 = vpack.c.b16 %v635, %v633
    %v716 = vpack.c.b16 %v636, %v634
    %v717 = vpack.c.b16 %v639, %v637
    %v718 = vpack.c.b16 %v640, %v638
    %v719 = vpack.c.b16 %v643, %v641
    %v720 = vpack.c.b16 %v644, %v642
    %v721 = vpack.c.b16 %v647, %v645
    %v722 = vpack.c.b16 %v648, %v646
    %v723 = vpack.c.b16 %v651, %v649
    %v724 = vpack.c.b16 %v652, %v650
    %v725 = vpack.c.b16 %v655, %v653
    %v726 = vpack.c.b16 %v656, %v654
    %v727 = vpack.c.b16 %v659, %v657
    %v728 = vpack.c.b16 %v660, %v658
    %v729 = vpack.c.b16 %v663, %v661
    %v730 = vpack.c.b16 %v664, %v662
    %v731 = vpack.c.b16 %v667, %v665
    %v732 = vpack.c.b16 %v668, %v666
    %797 = vmatprep.subr.bf16.mxu0 %v670
    %798 = vmatpush1.bf16.msra.mxu0 %v669
    %799 = vmatprep.subr.bf16.mxu0 %v672
    %800 = vmatpush1.bf16.msra.mxu0 %v671
    %801 = vmatprep.subr.bf16.mxu0 %v674
    %802 = vmatpush1.bf16.msra.mxu0 %v673
    %803 = vmatprep.subr.bf16.mxu0 %v676
    %804 = vmatpush1.bf16.msra.mxu0 %v675
    %805 = vmatprep.subr.bf16.mxu0 %v678
    %806 = vmatpush1.bf16.msra.mxu0 %v677
    %807 = vmatprep.subr.bf16.mxu0 %v680
    %808 = vmatpush1.bf16.msra.mxu0 %v679
    %809 = vmatprep.subr.bf16.mxu0 %v682
    %810 = vmatpush1.bf16.msra.mxu0 %v681
    %811 = vmatprep.subr.bf16.mxu0 %v684
    %812 = vmatpush1.bf16.msra.mxu0 %v683
    %813 = vmatprep.subr.bf16.mxu0 %v686
    %814 = vmatpush1.bf16.msra.mxu0 %v685
    %815 = vmatprep.subr.bf16.mxu0 %v688
    %816 = vmatpush1.bf16.msra.mxu0 %v687
    %817 = vmatprep.subr.bf16.mxu0 %v690
    %818 = vmatpush1.bf16.msra.mxu0 %v689
    %819 = vmatprep.subr.bf16.mxu0 %v692
    %820 = vmatpush1.bf16.msra.mxu0 %v691
    %821 = vmatprep.subr.bf16.mxu0 %v694
    %822 = vmatpush1.bf16.msra.mxu0 %v693
    %823 = vmatprep.subr.bf16.mxu0 %v696
    %824 = vmatpush1.bf16.msra.mxu0 %v695
    %825 = vmatprep.subr.bf16.mxu0 %v698
    %826 = vmatpush1.bf16.msra.mxu0 %v697
    %827 = vmatprep.subr.bf16.mxu0 %v700
    %828 = vmatpush1.bf16.msra.mxu0 %v699
    %829 = vmatprep.mubr.bf16.mxu0 %v398
    %830 = vmatmul.mubr.bf16.gmra.mrb[0].mxu0 %v397
    %v831 = vpop.f32.mrb[0].mxu0
    %v832 = vadd.f32 %v470, %v831
    %v833 = vpop.f32.mrb[0].mxu0
    %v834 = vadd.f32 %v474, %v833
    %v835 = vpop.f32.mrb[0].mxu0
    %v836 = vpop.f32.mrb[0].mxu0
    %837 = vdwg.mxu0
    %838 = vmatprep.subr.bf16.mxu0 %v702
    %839 = vmatpush1.bf16.msra.mxu0 %v701
    %840 = vmatprep.subr.bf16.mxu0 %v704
    %841 = vmatpush1.bf16.msra.mxu0 %v703
    %842 = vmatprep.subr.bf16.mxu0 %v706
    %843 = vmatpush1.bf16.msra.mxu0 %v705
    %844 = vmatprep.subr.bf16.mxu0 %v708
    %845 = vmatpush1.bf16.msra.mxu0 %v707
    %846 = vmatprep.subr.bf16.mxu0 %v710
    %847 = vmatpush1.bf16.msra.mxu0 %v709
    %848 = vmatprep.subr.bf16.mxu0 %v712
    %849 = vmatpush1.bf16.msra.mxu0 %v711
    %850 = vmatprep.subr.bf16.mxu0 %v714
    %851 = vmatpush1.bf16.msra.mxu0 %v713
    %852 = vmatprep.subr.bf16.mxu0 %v716
    %853 = vmatpush1.bf16.msra.mxu0 %v715
    %854 = vmatprep.subr.bf16.mxu0 %v718
    %855 = vmatpush1.bf16.msra.mxu0 %v717
    %856 = vmatprep.subr.bf16.mxu0 %v720
    %857 = vmatpush1.bf16.msra.mxu0 %v719
    %858 = vmatprep.subr.bf16.mxu0 %v722
    %859 = vmatpush1.bf16.msra.mxu0 %v721
    %860 = vmatprep.subr.bf16.mxu0 %v724
    %861 = vmatpush1.bf16.msra.mxu0 %v723
    %862 = vmatprep.subr.bf16.mxu0 %v726
    %863 = vmatpush1.bf16.msra.mxu0 %v725
    %864 = vmatprep.subr.bf16.mxu0 %v728
    %865 = vmatpush1.bf16.msra.mxu0 %v727
    %866 = vmatprep.subr.bf16.mxu0 %v730
    %867 = vmatpush1.bf16.msra.mxu0 %v729
    %868 = vmatprep.subr.bf16.mxu0 %v732
    %869 = vmatpush1.bf16.msra.mxu0 %v731
    %870 = vmatprep.mubr.bf16.mxu0 %v400
    %871 = vmatmul.mubr.bf16.gmra.mrb[0].mxu0 %v399
    %v872 = vpop.f32.mrb[0].mxu0
    %v873 = vadd.f32 %v832, %v872
    %v874 = vpop.f32.mrb[0].mxu0
    %v875 = vadd.f32 %v834, %v874
    %v876 = vpop.f32.mrb[0].mxu0
    %v877 = vpop.f32.mrb[0].mxu0
    %878 = vdwg.mxu0
    %vm879 = vcmp.gt.f32.partialorder %v873, 0.0
    %vm880 = vcmp.gt.f32.partialorder %v875, 0.0
    %v881 = vmul.f32 %v873, 0.2
    %v882 = vmul.f32 %v875, 0.2
    %v883 = vsel %vm879, %v873, %v881
    %v884 = vsel %vm880, %v875, %v882
    %v885 = vld [vmem:[%s5] sm:$0x3]
    %v886 = vpack.c.bf16 %v883, %v883
    %v887 = vpack.c.bf16 %v884, %v884
    %v888 = vld [vmem:[#allocation2] sm:$0x1]
    %890 = vset.pattern.permute.xlu0 0
    %891 = vperm.xlu0 %890, %v888
    %v892 = vpop.permute.xlu0 %891
    %v894 = vlaneseq
    %v895 = vshrl.u32 %v894, 7
    %v896 = vsub.s32 0, %v895
    %v897 = vrot.slane %v892, %v896
    %v900 = vunpack.c.l.s4 1966171168
    %v901 = vunpack.c.0.s8 %v900
    %v902 = vlaneseq
    %v903 = vshrl.u32 %v902, 7
    %v904 = vsub.s32 %v901, %v903
    %v905 = vrot.slane %v885, %v904
    %v906 = vcombine.high %v905, %v905
    %v908 = vunpack.c.l.s4 1966171168
    %v909 = vunpack.c.0.s8 %v908
    %v910 = vlaneseq
    %v911 = vshrl.u32 %v910, 7
    %v912 = vsub.s32 %v909, %v911
    %v913 = vrot.slane %v905, %v912
    %v915 = vunpack.c.l.s4 1966171168
    %v916 = vunpack.c.0.s8 %v915
    %v917 = vlaneseq
    %v918 = vshrl.u32 %v917, 7
    %v919 = vsub.s32 %v916, %v918
    %v920 = vrot.slane %v906, %v919
    %923 = vmatprep.subr.bf16.mxu0 %v887
    %924 = vmatpush1.bf16.xpose.msra.mxu0 %v886
    %925 = vmatprep.subr.bf16.mxu0 0
    %926 = vmatpush1.bf16.xpose.msra.mxu0 0
    %927 = vmatprep.subr.bf16.mxu0 0
    %928 = vmatpush1.bf16.xpose.msra.mxu0 0
    %929 = vmatprep.subr.bf16.mxu0 0
    %930 = vmatpush1.bf16.xpose.msra.mxu0 0
    %931 = vmatprep.subr.bf16.mxu0 0
    %932 = vmatpush1.bf16.xpose.msra.mxu0 0
    %933 = vmatprep.subr.bf16.mxu0 0
    %934 = vmatpush1.bf16.xpose.msra.mxu0 0
    %935 = vmatprep.subr.bf16.mxu0 0
    %936 = vmatpush1.bf16.xpose.msra.mxu0 0
    %937 = vmatprep.subr.bf16.mxu0 0
    %938 = vmatpush1.bf16.xpose.msra.mxu0 0
    %939 = vmatprep.subr.bf16.mxu0 0
    %940 = vmatpush1.bf16.xpose.msra.mxu0 0
    %941 = vmatprep.subr.bf16.mxu0 0
    %942 = vmatpush1.bf16.xpose.msra.mxu0 0
    %943 = vmatprep.subr.bf16.mxu0 0
    %944 = vmatpush1.bf16.xpose.msra.mxu0 0
    %945 = vmatprep.subr.bf16.mxu0 0
    %946 = vmatpush1.bf16.xpose.msra.mxu0 0
    %947 = vmatprep.subr.bf16.mxu0 0
    %948 = vmatpush1.bf16.xpose.msra.mxu0 0
    %949 = vmatprep.subr.bf16.mxu0 0
    %950 = vmatpush1.bf16.xpose.msra.mxu0 0
    %951 = vmatprep.subr.bf16.mxu0 0
    %952 = vmatpush1.bf16.xpose.msra.mxu0 0
    %953 = vmatprep.subr.bf16.mxu0 0
    %954 = vmatpush1.bf16.xpose.msra.mxu0 0
    %955 = vmatprep.mubr.bf16.mxu0 %v920
    %956 = vmatmul.mubr.bf16.gmra.mrb[0].mxu0 %v913
    %v957 = vpop.f32.mrb[0].mxu0
    %v958 = vadd.f32 %v897, %v957
    %v959 = vpop.f32.mrb[0].mxu0
    %v960 = vpop.f32.mrb[0].mxu0
    %v961 = vpop.f32.mrb[0].mxu0
    %962 = vdwg.mxu0
    %v963 = vxor.u32 %v958, 2147483648
    %v964 = vmul.f32 %v963, 1.442695
    %v965 = vpow.pop %v964
    %v966 = vadd.f32 %v965, 1.0
    %v967 = vrcp.pop %v966
    %v968 = vmul.f32 1.0, %v967
    %vm969 = vcmask 57344
    %970 = vst.msk [vmem:[%s7] sm:$0x1] %vm969, %v968
    // Predicated region
    $region38: #{discriminator_forward.1} parent=1 // pred_check
      _
    $region39: #{discriminator_forward.1} parent=1 // pred_check_branch
      %972 = sbr.rel (0) target = $region41
    $region40: #{discriminator_forward.1} parent=1 // pred_region
      _
    $region41: #{discriminator_forward.1} parent=1 // pred_fallthru
      _
    // Predicated region
    $region42: #{discriminator_forward.1} parent=1 // pred_check
      _
    $region43: #{discriminator_forward.1} parent=1 // pred_check_branch
      %974 = sbr.rel (0) target = $region45
    $region44: #{discriminator_forward.1} parent=1 // pred_region
      _
    $region45: #{discriminator_forward.1} parent=1 // pred_fallthru
      _
    %975 = vsyncpa [#allocation4], 1
    %976 = vsyncpa [#allocation6], 1

</llo_original>
